<compile_context>
chip_gen: v6e
topology: v6e:2x2x1
jax: 0.10.0
libtpu: 0.0.40
codegen_flags: <defaults>
</compile_context>

<pallas_src>
import jax
import jax.numpy as jnp
from jax import lax
from jax.experimental import pallas as pl
from jax.experimental.pallas import tpu as pltpu

# module hyper-parameters (small, consistent with the PyTorch module)
N_NODES = 16
IN_C = 32
OUT_C = 16
HEADS = 2
NEG_SLOPE = 0.2


def geolayer_kernel(x_ref, w_ref, attmat_ref, adj_ref, bias_ref, out_ref):
    # x:      (N, F_in)           w:    (F_in, H*C)
    # attmat: (H*C, 2H) block-diagonal; col h  -> attl[h] (pairs with x_i = x[edge_index[1]])
    #                                  col H+h -> attr[h] (pairs with x_j = x[edge_index[0]])
    # adj:    (N_src, N_dst)      bias: (1, H*C)          out: (N, H*C)

    # xw = torch.mm(x, weight): bf16 operands on the MXU, f32 accumulation.
    x_bf = x_ref[...].astype(jnp.bfloat16)
    w_bf = w_ref[...].astype(jnp.bfloat16)
    xw = jnp.dot(x_bf, w_bf, preferred_element_type=jnp.float32)        # (N, H*C)

    # All per-head attention contributions in one tiny matmul (kept in f32:
    # these feed exp(), so precision matters more than MXU rate here).
    a = jnp.dot(xw, attmat_ref[...], preferred_element_type=jnp.float32)  # (N, 2H)
    a_t = jnp.transpose(a)                                                # (2H, N), single transpose

    adj = adj_ref[...]

    for h in range(HEADS):                                   # static, tiny head loop
        # raw[s, t] = a_j[s] + a_i[t]  == (cat([x_i, x_j]) * att).sum(-1) per edge
        a_j = a[:, HEADS + h:HEADS + h + 1]                  # (N, 1)  source term (rows)
        a_i = a_t[h:h + 1, :]                                # (1, N)  target term (cols)
        raw = a_j + a_i                                      # (N_src, N_dst)
        raw = jnp.where(raw > 0, raw, NEG_SLOPE * raw)       # leaky_relu

        # segment softmax grouped by edge_index[0] (== source node s == row)
        masked = jnp.where(adj > 0, raw, -1e30)
        m = jnp.max(masked, axis=-1, keepdims=True)
        e = jnp.exp(masked - m)                              # underflows to exact 0 off-edges
        denom = jnp.sum(e, axis=-1, keepdims=True)
        inv_denom = pl.reciprocal(denom, approx=True)        # EUP slot, (N, 1)

        # Fold the softmax normalization into a per-row scale of xh, then
        # aggregate: out_h[t, c] = sum_s e[s, t] * (xh[s, c] * inv_denom[s])
        # (message x_j * alpha, scatter-add over edge_index[1] == target t).
        xh = xw[:, h * OUT_C:(h + 1) * OUT_C]                # (N, C) this head's features
        xh_scaled = xh * inv_denom                           # (N, C) VPU, N*C not N*N work
        out_h = lax.dot_general(
            e.astype(jnp.bfloat16), xh_scaled.astype(jnp.bfloat16),
            (((0,), (0,)), ((), ())),
            preferred_element_type=jnp.float32)              # (N_dst, C)

        # concat=True: write straight into this head's lane slice, bias fused.
        out_ref[:, h * OUT_C:(h + 1) * OUT_C] = (
            out_h + bias_ref[:, h * OUT_C:(h + 1) * OUT_C])


def geolayer_forward(x, weight, att, bias, edge_index):
    """Glue: self-loop handling, dense adjacency + block-diag attention matrix,
    then a single-block Pallas kernel call."""
    n = x.shape[0]
    src, dst = edge_index[0], edge_index[1]
    not_self = (src != dst).astype(jnp.float32)
    # remove_self_loops + add_self_loops(num_nodes=N)
    adj = jnp.zeros((n, n), jnp.float32)
    adj = adj.at[src, dst].set(not_self)                     # existing non-self edges
    diag = jnp.arange(n)
    adj = adj.at[diag, diag].set(1.0)                        # self loop for every node

    attl = att[0, :, :OUT_C]                                 # (H, C)
    attr = att[0, :, OUT_C:]                                 # (H, C)
    # block-diagonal attention matrix: xw @ attmat -> (N, 2H) of [a_i | a_j]
    attmat = jnp.zeros((HEADS * OUT_C, 2 * HEADS), jnp.float32)
    for h in range(HEADS):
        attmat = attmat.at[h * OUT_C:(h + 1) * OUT_C, h].set(attl[h])
        attmat = attmat.at[h * OUT_C:(h + 1) * OUT_C, HEADS + h].set(attr[h])

    bias2d = bias.reshape(1, HEADS * OUT_C)

    return pl.pallas_call(
        geolayer_kernel,
        out_shape=jax.ShapeDtypeStruct((n, HEADS * OUT_C), jnp.float32),
        grid=(1,),
        in_specs=[
            pl.BlockSpec(x.shape, lambda i: (0, 0)),
            pl.BlockSpec(weight.shape, lambda i: (0, 0)),
            pl.BlockSpec(attmat.shape, lambda i: (0, 0)),
            pl.BlockSpec(adj.shape, lambda i: (0, 0)),
            pl.BlockSpec(bias2d.shape, lambda i: (0, 0)),
        ],
        out_specs=pl.BlockSpec((n, HEADS * OUT_C), lambda i: (0, 0)),
        compiler_params=pltpu.CompilerParams(dimension_semantics=("arbitrary",)),
    )(x, weight, attmat, adj, bias2d)


def geolayer_reference(x, weight, att, bias, src, dst, n):
    """Pure-JAX (f32) edge-list reference matching the PyTorch message passing."""
    xw = (x @ weight).reshape(n, HEADS, OUT_C)
    x_i = xw[dst]                                            # edge_index[1] (i=1, source_to_target)
    x_j = xw[src]                                            # edge_index[0]
    attl = att[0, :, :OUT_C]
    attr = att[0, :, OUT_C:]
    alpha = (x_i * attl[None]).sum(-1) + (x_j * attr[None]).sum(-1)   # (E, H)
    alpha = jnp.where(alpha > 0, alpha, NEG_SLOPE * alpha)
    amax = jax.ops.segment_max(alpha, src, num_segments=n)[src]
    e = jnp.exp(alpha - amax)
    denom = jax.ops.segment_sum(e, src, num_segments=n)[src]
    alpha = e / denom
    msg = x_j * alpha[:, :, None]
    out = jax.ops.segment_sum(msg, dst, num_segments=n)      # scatter_add over edge_index[1]
    return out.reshape(n, HEADS * OUT_C) + bias


if __name__ == "__main__":
    key = jax.random.PRNGKey(0)
    k_x, k_w, k_a = jax.random.split(key, 3)

    # deterministic parameter init (glorot-uniform like reset_parameters, bias zeros)
    x = jax.random.normal(k_x, (N_NODES, IN_C), jnp.float32)
    wa = (6.0 / (IN_C + HEADS * OUT_C)) ** 0.5
    weight = jax.random.uniform(k_w, (IN_C, HEADS * OUT_C), jnp.float32, -wa, wa)
    aa = (6.0 / (HEADS + 2 * OUT_C)) ** 0.5
    att = jax.random.uniform(k_a, (1, HEADS, 2 * OUT_C), jnp.float32, -aa, aa)
    bias = jnp.zeros((HEADS * OUT_C,), jnp.float32)

    # deterministic edge_index (directed ring both ways, no self loops, no duplicates)
    idx = jnp.arange(N_NODES)
    src = jnp.concatenate([idx, (idx + 1) % N_NODES])
    dst = jnp.concatenate([(idx + 1) % N_NODES, idx])
    edge_index = jnp.stack([src, dst], axis=0)               # (2, E)

    out = geolayer_forward(x, weight, att, bias, edge_index)
    out = jax.block_until_ready(out)

    # correctness check vs the f32 edge-list reference (with self loops added).
    # tolerance loosened for bf16 MXU operands + approx reciprocal.
    src_sl = jnp.concatenate([src, idx])
    dst_sl = jnp.concatenate([dst, idx])
    ref = geolayer_reference(x, weight, att, bias, src_sl, dst_sl, N_NODES)
    assert jnp.allclose(out, ref, rtol=5e-2, atol=5e-2), "mismatch vs reference"

    print("KERNEL_OK")
</pallas_src>

<mosaic_0001>
module attributes {stable_mosaic.version = 11 : i64} {
  func.func @geolayer_kernel(%arg0: i32, %arg1: memref<16x32xf32, #tpu.memory_space<vmem>>, %arg2: memref<32x32xf32, #tpu.memory_space<vmem>>, %arg3: memref<32x4xf32, #tpu.memory_space<vmem>>, %arg4: memref<16x16xf32, #tpu.memory_space<vmem>>, %arg5: memref<1x32xf32, #tpu.memory_space<vmem>>, %arg6: memref<16x32xf32, #tpu.memory_space<vmem>>) attributes {dimension_semantics = [#tpu.dimension_semantics<arbitrary>], iteration_bounds = array<i64: 1>, scalar_prefetch = 0 : i64, scratch_operands = 0 : i64, tpu.core_type = #tpu.core_type<tc>, window_params = [{pipeline_mode = #tpu.pipeline_mode<synchronous>, transform_indices = @transform_0, window_bounds = array<i64: 16, 32>}, {pipeline_mode = #tpu.pipeline_mode<synchronous>, transform_indices = @transform_1, window_bounds = array<i64: 32, 32>}, {pipeline_mode = #tpu.pipeline_mode<synchronous>, transform_indices = @transform_2, window_bounds = array<i64: 32, 4>}, {pipeline_mode = #tpu.pipeline_mode<synchronous>, transform_indices = @transform_3, window_bounds = array<i64: 16, 16>}, {pipeline_mode = #tpu.pipeline_mode<synchronous>, transform_indices = @transform_4, window_bounds = array<i64: 1, 32>}, {pipeline_mode = #tpu.pipeline_mode<synchronous>, transform_indices = @transform_5, window_bounds = array<i64: 16, 32>}]} {
    %c0 = arith.constant 0 : index
    %c0_0 = arith.constant 0 : index
    %0 = vector.load %arg1[%c0, %c0_0] : memref<16x32xf32, #tpu.memory_space<vmem>>, vector<16x32xf32>
    %1 = arith.truncf %0 : vector<16x32xf32> to vector<16x32xbf16>
    %c0_1 = arith.constant 0 : index
    %c0_2 = arith.constant 0 : index
    %2 = vector.load %arg2[%c0_1, %c0_2] : memref<32x32xf32, #tpu.memory_space<vmem>>, vector<32x32xf32>
    %3 = arith.truncf %2 : vector<32x32xf32> to vector<32x32xbf16>
    %cst = arith.constant dense<0.000000e+00> : vector<16x32xf32>
    %4 = tpu.matmul %1, %3, %cst {dimension_numbers = #tpu.dot_dimension_numbers<[1], [0], [0], [1], [0, 0, 1, 1], [], []>} : vector<16x32xbf16>, vector<32x32xbf16>, vector<16x32xf32> -> vector<16x32xf32>
    %c0_3 = arith.constant 0 : index
    %c0_4 = arith.constant 0 : index
    %5 = vector.load %arg3[%c0_3, %c0_4] : memref<32x4xf32, #tpu.memory_space<vmem>>, vector<32x4xf32>
    %cst_5 = arith.constant dense<0.000000e+00> : vector<16x4xf32>
    %6 = tpu.matmul %4, %5, %cst_5 {dimension_numbers = #tpu.dot_dimension_numbers<[1], [0], [0], [1], [0, 0, 1, 1], [], []>} : vector<16x32xf32>, vector<32x4xf32>, vector<16x4xf32> -> vector<16x4xf32>
    %7 = tpu.transpose %6, [1, 0] : vector<16x4xf32> -> vector<4x16xf32>
    %c0_6 = arith.constant 0 : index
    %c0_7 = arith.constant 0 : index
    %8 = vector.load %arg4[%c0_6, %c0_7] : memref<16x16xf32, #tpu.memory_space<vmem>>, vector<16x16xf32>
    %9 = vector.extract_strided_slice %6 {offsets = [0, 2], sizes = [16, 1], strides = [1, 1]} : vector<16x4xf32> to vector<16x1xf32>
    %10 = vector.extract_strided_slice %7 {offsets = [0, 0], sizes = [1, 16], strides = [1, 1]} : vector<4x16xf32> to vector<1x16xf32>
    %11 = vector.broadcast %9 : vector<16x1xf32> to vector<16x16xf32>
    %12 = vector.broadcast %10 : vector<1x16xf32> to vector<16x16xf32>
    %13 = arith.addf %11, %12 : vector<16x16xf32>
    %cst_8 = arith.constant 0.000000e+00 : f32
    %14 = vector.broadcast %cst_8 : f32 to vector<16x16xf32>
    %15 = arith.cmpf ogt, %13, %14 : vector<16x16xf32>
    %cst_9 = arith.constant 2.000000e-01 : f32
    %16 = vector.broadcast %cst_9 : f32 to vector<16x16xf32>
    %17 = arith.mulf %16, %13 : vector<16x16xf32>
    %18 = arith.select %15, %13, %17 : vector<16x16xi1>, vector<16x16xf32>
    %cst_10 = arith.constant 0.000000e+00 : f32
    %19 = vector.broadcast %cst_10 : f32 to vector<16x16xf32>
    %20 = arith.cmpf ogt, %8, %19 : vector<16x16xf32>
    %cst_11 = arith.constant -1.000000e+30 : f32
    %21 = vector.broadcast %cst_11 : f32 to vector<16x16xf32>
    %22 = arith.select %20, %18, %21 : vector<16x16xi1>, vector<16x16xf32>
    %cst_12 = arith.constant dense<0xFF800000> : vector<16xf32>
    %23 = vector.multi_reduction <maximumf>, %22, %cst_12 [1] : vector<16x16xf32> to vector<16xf32>
    %24 = vector.shape_cast %23 : vector<16xf32> to vector<16x1xf32>
    %25 = vector.broadcast %24 : vector<16x1xf32> to vector<16x16xf32>
    %26 = arith.subf %22, %25 : vector<16x16xf32>
    %27 = math.exp %26 : vector<16x16xf32>
    %cst_13 = arith.constant dense<0.000000e+00> : vector<16xf32>
    %28 = vector.multi_reduction <add>, %27, %cst_13 [1] : vector<16x16xf32> to vector<16xf32>
    %29 = vector.shape_cast %28 : vector<16xf32> to vector<16x1xf32>
    %30 = tpu.reciprocal %29 {approx = true} : vector<16x1xf32> -> vector<16x1xf32>
    %31 = vector.extract_strided_slice %4 {offsets = [0, 0], sizes = [16, 16], strides = [1, 1]} : vector<16x32xf32> to vector<16x16xf32>
    %32 = vector.broadcast %30 : vector<16x1xf32> to vector<16x16xf32>
    %33 = arith.mulf %31, %32 : vector<16x16xf32>
    %34 = arith.truncf %27 : vector<16x16xf32> to vector<16x16xbf16>
    %35 = arith.truncf %33 : vector<16x16xf32> to vector<16x16xbf16>
    %cst_14 = arith.constant dense<0.000000e+00> : vector<16x16xf32>
    %36 = tpu.matmul %34, %35, %cst_14 {dimension_numbers = #tpu.dot_dimension_numbers<[0], [0], [1], [1], [0, 1, 1, 1], [], []>} : vector<16x16xbf16>, vector<16x16xbf16>, vector<16x16xf32> -> vector<16x16xf32>
    %c0_15 = arith.constant 0 : index
    %c0_16 = arith.constant 0 : index
    %37 = vector.load %arg5[%c0_15, %c0_16] : memref<1x32xf32, #tpu.memory_space<vmem>>, vector<1x16xf32>
    %38 = vector.broadcast %37 : vector<1x16xf32> to vector<16x16xf32>
    %39 = arith.addf %36, %38 : vector<16x16xf32>
    %c0_17 = arith.constant 0 : index
    %c0_18 = arith.constant 0 : index
    %40 = vector.load %arg6[%c0_17, %c0_18] : memref<16x32xf32, #tpu.memory_space<vmem>>, vector<16x16xf32>
    tpu.vector_store %arg6[%c0_17, %c0_18], %39 {strides = array<i32>} : memref<16x32xf32, #tpu.memory_space<vmem>>, vector<16x16xf32>,
    %41 = vector.extract_strided_slice %6 {offsets = [0, 3], sizes = [16, 1], strides = [1, 1]} : vector<16x4xf32> to vector<16x1xf32>
    %42 = vector.extract_strided_slice %7 {offsets = [1, 0], sizes = [1, 16], strides = [1, 1]} : vector<4x16xf32> to vector<1x16xf32>
    %43 = vector.broadcast %41 : vector<16x1xf32> to vector<16x16xf32>
    %44 = vector.broadcast %42 : vector<1x16xf32> to vector<16x16xf32>
    %45 = arith.addf %43, %44 : vector<16x16xf32>
    %cst_19 = arith.constant 0.000000e+00 : f32
    %46 = vector.broadcast %cst_19 : f32 to vector<16x16xf32>
    %47 = arith.cmpf ogt, %45, %46 : vector<16x16xf32>
    %cst_20 = arith.constant 2.000000e-01 : f32
    %48 = vector.broadcast %cst_20 : f32 to vector<16x16xf32>
    %49 = arith.mulf %48, %45 : vector<16x16xf32>
    %50 = arith.select %47, %45, %49 : vector<16x16xi1>, vector<16x16xf32>
    %cst_21 = arith.constant 0.000000e+00 : f32
    %51 = vector.broadcast %cst_21 : f32 to vector<16x16xf32>
    %52 = arith.cmpf ogt, %8, %51 : vector<16x16xf32>
    %cst_22 = arith.constant -1.000000e+30 : f32
    %53 = vector.broadcast %cst_22 : f32 to vector<16x16xf32>
    %54 = arith.select %52, %50, %53 : vector<16x16xi1>, vector<16x16xf32>
    %cst_23 = arith.constant dense<0xFF800000> : vector<16xf32>
    %55 = vector.multi_reduction <maximumf>, %54, %cst_23 [1] : vector<16x16xf32> to vector<16xf32>
    %56 = vector.shape_cast %55 : vector<16xf32> to vector<16x1xf32>
    %57 = vector.broadcast %56 : vector<16x1xf32> to vector<16x16xf32>
    %58 = arith.subf %54, %57 : vector<16x16xf32>
    %59 = math.exp %58 : vector<16x16xf32>
    %cst_24 = arith.constant dense<0.000000e+00> : vector<16xf32>
    %60 = vector.multi_reduction <add>, %59, %cst_24 [1] : vector<16x16xf32> to vector<16xf32>
    %61 = vector.shape_cast %60 : vector<16xf32> to vector<16x1xf32>
    %62 = tpu.reciprocal %61 {approx = true} : vector<16x1xf32> -> vector<16x1xf32>
    %63 = vector.extract_strided_slice %4 {offsets = [0, 16], sizes = [16, 16], strides = [1, 1]} : vector<16x32xf32> to vector<16x16xf32>
    %64 = vector.broadcast %62 : vector<16x1xf32> to vector<16x16xf32>
    %65 = arith.mulf %63, %64 : vector<16x16xf32>
    %66 = arith.truncf %59 : vector<16x16xf32> to vector<16x16xbf16>
    %67 = arith.truncf %65 : vector<16x16xf32> to vector<16x16xbf16>
    %cst_25 = arith.constant dense<0.000000e+00> : vector<16x16xf32>
    %68 = tpu.matmul %66, %67, %cst_25 {dimension_numbers = #tpu.dot_dimension_numbers<[0], [0], [1], [1], [0, 1, 1, 1], [], []>} : vector<16x16xbf16>, vector<16x16xbf16>, vector<16x16xf32> -> vector<16x16xf32>
    %c0_26 = arith.constant 0 : index
    %c16 = arith.constant 16 : index
    %69 = vector.load %arg5[%c0_26, %c16] : memref<1x32xf32, #tpu.memory_space<vmem>>, vector<1x16xf32>
    %70 = vector.broadcast %69 : vector<1x16xf32> to vector<16x16xf32>
    %71 = arith.addf %68, %70 : vector<16x16xf32>
    %c0_27 = arith.constant 0 : index
    %c16_28 = arith.constant 16 : index
    %72 = vector.load %arg6[%c0_27, %c16_28] : memref<16x32xf32, #tpu.memory_space<vmem>>, vector<16x16xf32>
    tpu.vector_store %arg6[%c0_27, %c16_28], %71 {strides = array<i32>} : memref<16x32xf32, #tpu.memory_space<vmem>>, vector<16x16xf32>,
    return
  }
  func.func @transform_0(%arg0: i32) -> (i32, i32) {
    %c0_i32 = arith.constant 0 : i32
    %c0_i32_0 = arith.constant 0 : i32
    %c0_i32_1 = arith.constant 0 : i32
    return %c0_i32, %c0_i32_0 : i32, i32
  }
  func.func @transform_1(%arg0: i32) -> (i32, i32) {
    %c0_i32 = arith.constant 0 : i32
    %c0_i32_0 = arith.constant 0 : i32
    %c0_i32_1 = arith.constant 0 : i32
    return %c0_i32, %c0_i32_0 : i32, i32
  }
  func.func @transform_2(%arg0: i32) -> (i32, i32) {
    %c0_i32 = arith.constant 0 : i32
    %c0_i32_0 = arith.constant 0 : i32
    %c0_i32_1 = arith.constant 0 : i32
    return %c0_i32, %c0_i32_0 : i32, i32
  }
  func.func @transform_3(%arg0: i32) -> (i32, i32) {
    %c0_i32 = arith.constant 0 : i32
    %c0_i32_0 = arith.constant 0 : i32
    %c0_i32_1 = arith.constant 0 : i32
    return %c0_i32, %c0_i32_0 : i32, i32
  }
  func.func @transform_4(%arg0: i32) -> (i32, i32) {
    %c0_i32 = arith.constant 0 : i32
    %c0_i32_0 = arith.constant 0 : i32
    %c0_i32_1 = arith.constant 0 : i32
    return %c0_i32, %c0_i32_0 : i32, i32
  }
  func.func @transform_5(%arg0: i32) -> (i32, i32) {
    %c0_i32 = arith.constant 0 : i32
    %c0_i32_0 = arith.constant 0 : i32
    %c0_i32_1 = arith.constant 0 : i32
    return %c0_i32, %c0_i32_0 : i32, i32
  }
}

</mosaic_0001>

<llo_original>
// kernel: tpu_custom_call.1
$region0: #{tpu_custom_call.1}
  #allocation0 [shape = 'u32[]', space=smem, size = 0x4, offset = 0x4, fixed_abs, tag = 'smem constant byte address 0x4 - core index']
  #allocation1 [shape = 'u32[144,128]{1,0:T(1,128)}', space=vmem, size = 0x12000, scoped, tag = 'internal scratch']
  %s0 = inlined_call_operand.hbm [shape: f32[16,32], index: 0, kind: input, shape index: {}]
  %s1 = inlined_call_operand.vmem [shape: f32[32,32], index: 1, kind: input, shape index: {}]
  %s2 = inlined_call_operand.vmem [shape: f32[32,4], index: 2, kind: input, shape index: {}]
  %s3 = inlined_call_operand.hbm [shape: f32[16,16], index: 3, kind: input, shape index: {}]
  %s4 = inlined_call_operand.vmem [shape: f32[1,32], index: 4, kind: input, shape index: {}]
  %s5 = inlined_call_operand.hbm [shape: f32[16,32], index: 5, kind: output, shape index: {}]
  %s6 = sld [smem:[#allocation0]]
  $region38: #{tpu_custom_call.1} parent=0
    _
  %s8 = ssub.s32 1, %s6
  %s9 = scalar_select 0, %s8, %s6
  $region1: #{tpu_custom_call.1} parent=0
    #allocation2 [shape = 'u8[8192]{0}', space=vmem, size = 0x2000, scoped, tag = 'input window, operand 0, single buffered']
    #allocation3 [shape = 's32[1]{0}', space=sflag, size = 0x4, scoped, tag = 'scoped memory for tpu_custom_call.1']
    #allocation4 [shape = 's32[1]{0}', space=sflag, size = 0x4, scoped, tag = 'scoped memory for tpu_custom_call.1']
    #allocation5 [shape = 'u8[8192]{0}', space=vmem, size = 0x2000, scoped, tag = 'input window, operand 3, single buffered']
    #allocation6 [shape = 's32[1]{0}', space=sflag, size = 0x4, scoped, tag = 'scoped memory for tpu_custom_call.1']
    #allocation7 [shape = 'u8[8192]{0}', space=vmem, size = 0x2000, scoped, tag = 'output window, operand 0, single buffered']
    %10 = vsyncpa [#allocation3], 0
    %11 = vsyncpa [#allocation6], 0
    %12 = vsyncpa [#allocation4], 0
    // Predicated region
    $region2: #{tpu_custom_call.1} parent=1 // pred_check
      _
    $region3: #{tpu_custom_call.1} parent=1 // pred_check_branch
      %14 = sbr.rel (0) target = $region5
    $region4: #{tpu_custom_call.1} parent=1 // pred_region
      %s16 = ssub.s32 256, 256
      %17 = vsyncadd [#allocation3], %s16
      %s18 = sshll.u32 [#allocation2], 4
      %s19 = int_to_ptr.vmem [resolvable:$true] %s18
      %24 = dma.hbm_to_vmem [thread:$0]  %s0, 256, %s19, [#allocation3], 128, 128, 8
    $region5: #{tpu_custom_call.1} parent=1 // pred_fallthru
      _
    // Predicated region
    $region6: #{tpu_custom_call.1} parent=1 // pred_check
      _
    $region7: #{tpu_custom_call.1} parent=1 // pred_check_branch
      %26 = sbr.rel (0) target = $region9
    $region8: #{tpu_custom_call.1} parent=1 // pred_region
      _
    $region9: #{tpu_custom_call.1} parent=1 // pred_fallthru
      _
    // Predicated region
    $region10: #{tpu_custom_call.1} parent=1 // pred_check
      _
    $region11: #{tpu_custom_call.1} parent=1 // pred_check_branch
      %28 = sbr.rel (0) target = $region13
    $region12: #{tpu_custom_call.1} parent=1 // pred_region
      _
    $region13: #{tpu_custom_call.1} parent=1 // pred_fallthru
      _
    // Predicated region
    $region14: #{tpu_custom_call.1} parent=1 // pred_check
      _
    $region15: #{tpu_custom_call.1} parent=1 // pred_check_branch
      %30 = sbr.rel (0) target = $region17
    $region16: #{tpu_custom_call.1} parent=1 // pred_region
      %s32 = ssub.s32 256, 256
      %33 = vsyncadd [#allocation6], %s32
      %s34 = sshll.u32 [#allocation5], 4
      %s35 = int_to_ptr.vmem [resolvable:$true] %s34
      %40 = dma.hbm_to_vmem [thread:$0]  %s3, 256, %s35, [#allocation6], 128, 128, 8
    $region17: #{tpu_custom_call.1} parent=1 // pred_fallthru
      _
    // Predicated region
    $region18: #{tpu_custom_call.1} parent=1 // pred_check
      _
    $region19: #{tpu_custom_call.1} parent=1 // pred_check_branch
      %42 = sbr.rel (0) target = $region21
    $region20: #{tpu_custom_call.1} parent=1 // pred_region
      _
    $region21: #{tpu_custom_call.1} parent=1 // pred_fallthru
      _
    // Predicated region
    $region22: #{tpu_custom_call.1} parent=1 // pred_check
      _
    $region23: #{tpu_custom_call.1} parent=1 // pred_check_branch
      %44 = sbr.rel (0) target = $region25
    $region24: #{tpu_custom_call.1} parent=1 // pred_region
      %45 = dma.done [#allocation3], 256
    $region25: #{tpu_custom_call.1} parent=1 // pred_fallthru
      _
    // Predicated region
    $region26: #{tpu_custom_call.1} parent=1 // pred_check
      _
    $region27: #{tpu_custom_call.1} parent=1 // pred_check_branch
      %47 = sbr.rel (0) target = $region29
    $region28: #{tpu_custom_call.1} parent=1 // pred_region
      %48 = dma.done [#allocation6], 256
    $region29: #{tpu_custom_call.1} parent=1 // pred_fallthru
      _
    %v50 = vld [vmem:[#allocation2] sm:$0xff]
    %v51 = vld [vmem:[#allocation2 + $0x8] sm:$0xff]
    %v52 = vpack.c.bf16 %v51, %v50
    %v53 = vld [vmem:[%s1] sm:$0xff]
    %v54 = vld [vmem:[%s1 + $0x8] sm:$0xff]
    %v55 = vld [vmem:[%s1 + $0x10] sm:$0xff]
    %v56 = vld [vmem:[%s1 + $0x18] sm:$0xff]
    %v57 = vpack.c.bf16 %v54, %v53
    %v58 = vpack.c.bf16 %v56, %v55
    %vm59 = vcmask 261120
    %v61 = vsel %vm59, %v52, 0
    %63 = vmatprep.subr.bf16.mxu0 0
    %64 = vmatpush1.bf16.msra.mxu0 0
    %65 = vmatprep.subr.bf16.mxu0 0
    %66 = vmatpush1.bf16.msra.mxu0 0
    %67 = vmatprep.subr.bf16.mxu0 0
    %68 = vmatpush1.bf16.msra.mxu0 0
    %69 = vmatprep.subr.bf16.mxu0 0
    %70 = vmatpush1.bf16.msra.mxu0 0
    %71 = vmatprep.subr.bf16.mxu0 0
    %72 = vmatpush1.bf16.msra.mxu0 0
    %73 = vmatprep.subr.bf16.mxu0 0
    %74 = vmatpush1.bf16.msra.mxu0 0
    %75 = vmatprep.subr.bf16.mxu0 0
    %76 = vmatpush1.bf16.msra.mxu0 %v58
    %77 = vmatprep.subr.bf16.mxu0 0
    %78 = vmatpush1.bf16.msra.mxu0 %v57
    %79 = vmatprep.subr.bf16.mxu0 0
    %80 = vmatpush2.bf16.msra.mxu0 0
    %81 = vmatprep.subr.bf16.mxu0 0
    %82 = vmatpush2.bf16.msra.mxu0 0
    %83 = vmatprep.subr.bf16.mxu0 0
    %84 = vmatpush2.bf16.msra.mxu0 0
    %85 = vmatprep.subr.bf16.mxu0 0
    %86 = vmatpush2.bf16.msra.mxu0 0
    %87 = vmatprep.subr.bf16.mxu0 0
    %88 = vmatpush2.bf16.msra.mxu0 0
    %89 = vmatprep.subr.bf16.mxu0 0
    %90 = vmatpush2.bf16.msra.mxu0 0
    %91 = vmatprep.subr.bf16.mxu0 0
    %92 = vmatpush2.bf16.msra.mxu0 0
    %93 = vmatprep.subr.bf16.mxu0 0
    %94 = vmatpush2.bf16.msra.mxu0 0
    %95 = vmatprep.mubr.bf16.mxu0 0
    %96 = vmatmul.mubr.bf16.gmra.mxu0 %v61
    %v97 = vpop.f32.mrf.mxu0
    %v98 = vadd.f32 0.0, %v97
    %v99 = vpop.f32.mrf.mxu0
    %v100 = vpop.f32.mrf.mxu0
    %v101 = vadd.f32 0.0, %v100
    %v102 = vpop.f32.mrf.mxu0
    %103 = vdwg.mxu0
    %v104 = vld [vmem:[%s2] sm:$0xff]
    %v105 = vld [vmem:[%s2 + $0x8] sm:$0xff]
    %v106 = vld [vmem:[%s2 + $0x10] sm:$0xff]
    %v107 = vld [vmem:[%s2 + $0x18] sm:$0xff]
    %v109 = vsel %vm59, %v98, 0
    %v112 = vsel %vm59, %v101, 0
    %114 = vmatprep.subr.mxu0 0.0
    %115 = vmatpush1.msra.mxu0 0.0
    %116 = vmatprep.subr.mxu0 0.0
    %117 = vmatpush1.msra.mxu0 0.0
    %118 = vmatprep.subr.mxu0 0.0
    %119 = vmatpush1.msra.mxu0 0.0
    %120 = vmatprep.subr.mxu0 0.0
    %121 = vmatpush1.msra.mxu0 0.0
    %122 = vmatprep.subr.mxu0 0.0
    %123 = vmatpush1.msra.mxu0 0.0
    %124 = vmatprep.subr.mxu0 0.0
    %125 = vmatpush1.msra.mxu0 0.0
    %126 = vmatprep.subr.mxu0 0.0
    %127 = vmatpush1.msra.mxu0 0.0
    %128 = vmatprep.subr.mxu0 0.0
    %129 = vmatpush1.msra.mxu0 0.0
    %130 = vmatprep.subr.mxu0 0.0
    %131 = vmatpush1.msra.mxu0 0.0
    %132 = vmatprep.subr.mxu0 0.0
    %133 = vmatpush1.msra.mxu0 0.0
    %134 = vmatprep.subr.mxu0 0.0
    %135 = vmatpush1.msra.mxu0 0.0
    %136 = vmatprep.subr.mxu0 0.0
    %137 = vmatpush1.msra.mxu0 0.0
    %138 = vmatprep.subr.mxu0 0.0
    %139 = vmatpush1.msra.mxu0 %v107
    %140 = vmatprep.subr.mxu0 0.0
    %141 = vmatpush1.msra.mxu0 %v106
    %142 = vmatprep.subr.mxu0 0.0
    %143 = vmatpush1.msra.mxu0 %v105
    %144 = vmatprep.subr.mxu0 0.0
    %145 = vmatpush1.msra.mxu0 %v104
    %146 = vmatprep.subr.mxu0 0.0
    %147 = vmatpush2.msra.mxu0 0.0
    %148 = vmatprep.subr.mxu0 0.0
    %149 = vmatpush2.msra.mxu0 0.0
    %150 = vmatprep.subr.mxu0 0.0
    %151 = vmatpush2.msra.mxu0 0.0
    %152 = vmatprep.subr.mxu0 0.0
    %153 = vmatpush2.msra.mxu0 0.0
    %154 = vmatprep.subr.mxu0 0.0
    %155 = vmatpush2.msra.mxu0 0.0
    %156 = vmatprep.subr.mxu0 0.0
    %157 = vmatpush2.msra.mxu0 0.0
    %158 = vmatprep.subr.mxu0 0.0
    %159 = vmatpush2.msra.mxu0 0.0
    %160 = vmatprep.subr.mxu0 0.0
    %161 = vmatpush2.msra.mxu0 0.0
    %162 = vmatprep.subr.mxu0 0.0
    %163 = vmatpush2.msra.mxu0 0.0
    %164 = vmatprep.subr.mxu0 0.0
    %165 = vmatpush2.msra.mxu0 0.0
    %166 = vmatprep.subr.mxu0 0.0
    %167 = vmatpush2.msra.mxu0 0.0
    %168 = vmatprep.subr.mxu0 0.0
    %169 = vmatpush2.msra.mxu0 0.0
    %170 = vmatprep.subr.mxu0 0.0
    %171 = vmatpush2.msra.mxu0 0.0
    %172 = vmatprep.subr.mxu0 0.0
    %173 = vmatpush2.msra.mxu0 0.0
    %174 = vmatprep.subr.mxu0 0.0
    %175 = vmatpush2.msra.mxu0 0.0
    %176 = vmatprep.subr.mxu0 0.0
    %177 = vmatpush2.msra.mxu0 0.0
    %178 = vmatprep.mubr.f32.mxu0 0.0
    %179 = vmatmul.mubr.f32.gmra.mxu0 %v109
    %v180 = vpop.f32.mrf.mxu0
    %v181 = vadd.f32 0.0, %v180
    %v182 = vpop.f32.mrf.mxu0
    %183 = vmatprep.mubr.f32.mxu0 0.0
    %184 = vmatmul.mubr.f32.gmra.mxu0 %v112
    %v185 = vpop.f32.mrf.mxu0
    %v186 = vadd.f32 0.0, %v185
    %v187 = vpop.f32.mrf.mxu0
    %188 = vdwg.mxu0
    %189 = vxpose.xlu0.b32.start [1/16] %v181, 128
    %190 = vxpose.xlu0.b32.cont [2/16] %v186, 128
    %191 = vxpose.xlu0.b32.cont [3/16] 0.0, 128
    %192 = vxpose.xlu0.b32.cont [4/16] 0.0, 128
    %193 = vxpose.xlu0.b32.cont [5/16] 0.0, 128
    %194 = vxpose.xlu0.b32.cont [6/16] 0.0, 128
    %195 = vxpose.xlu0.b32.cont [7/16] 0.0, 128
    %196 = vxpose.xlu0.b32.cont [8/16] 0.0, 128
    %197 = vxpose.xlu0.b32.cont [9/16] 0.0, 128
    %198 = vxpose.xlu0.b32.cont [10/16] 0.0, 128
    %199 = vxpose.xlu0.b32.cont [11/16] 0.0, 128
    %200 = vxpose.xlu0.b32.cont [12/16] 0.0, 128
    %201 = vxpose.xlu0.b32.cont [13/16] 0.0, 128
    %202 = vxpose.xlu0.b32.cont [14/16] 0.0, 128
    %203 = vxpose.xlu0.b32.cont [15/16] 0.0, 128
    %204 = vxpose.xlu0.b32.end [16/16] 0.0, 128
    %v205 = vpop.trf.xlu0
    %v206 = vpop.trf.xlu0
    %v207 = vpop.trf.xlu0
    %v208 = vpop.trf.xlu0
    %v209 = vpop.trf.xlu0
    %v210 = vpop.trf.xlu0
    %v211 = vpop.trf.xlu0
    %v212 = vpop.trf.xlu0
    %v213 = vpop.trf.xlu0
    %v214 = vpop.trf.xlu0
    %v215 = vpop.trf.xlu0
    %v216 = vpop.trf.xlu0
    %v217 = vpop.trf.xlu0
    %v218 = vpop.trf.xlu0
    %v219 = vpop.trf.xlu0
    %v220 = vpop.trf.xlu0
    %v221 = vld [vmem:[#allocation5] sm:$0xff]
    %v222 = vld [vmem:[#allocation5 + $0x8] sm:$0xff]
    %224 = vset.pattern.permute.xlu0 2
    %225 = vperm.xlu0 %224, %v181
    %v226 = vpop.permute.xlu0 %225
    %229 = vset.pattern.permute.xlu0 2
    %230 = vperm.xlu0 %229, %v186
    %v231 = vpop.permute.xlu0 %230
    %v233 = vlaneseq
    %v234 = vshrl.u32 %v233, 7
    %v235 = vsub.s32 0, %v234
    %v236 = vrot.slane %v205, %v235
    %v237 = vadd.f32 %v226, %v236
    %v238 = vadd.f32 %v231, %v236
    %vm239 = vcmp.gt.f32.partialorder %v237, 0.0
    %vm240 = vcmp.gt.f32.partialorder %v238, 0.0
    %v241 = vmul.f32 %v237, 0.2
    %v242 = vmul.f32 %v238, 0.2
    %v243 = vsel %vm239, %v237, %v241
    %v244 = vsel %vm240, %v238, %v242
    %vm245 = vcmp.gt.f32.partialorder %v221, 0.0
    %vm246 = vcmp.gt.f32.partialorder %v222, 0.0
    %v247 = vsel %vm245, %v243, -1e+30
    %v248 = vsel %vm246, %v244, -1e+30
    %vm249 = vcmask 130048
    %v250 = vsel %vm249, %v247, -inf
    %251 = vmax.xlane.f32.xlu0 %v250
    %v252 = vpop.xlane.xlu0 %251
    %v253 = vsel %vm249, %v248, -inf
    %254 = vmax.xlane.f32.xlu0 %v253
    %v255 = vpop.xlane.xlu0 %254
    %v256 = vsub.f32 %v247, %v252
    %v257 = vsub.f32 %v248, %v255
    %v258 = vmul.f32 %v256, 1.442695
    %v259 = vpow.pop %v258
    %v260 = vmul.f32 %v257, 1.442695
    %v261 = vpow.pop %v260
    %v262 = vsel %vm249, %v259, 0.0
    %263 = vadd.xlane.f32.xlu0 %v262
    %v264 = vpop.xlane.xlu0 %263
    %v265 = vsel %vm249, %v261, 0.0
    %266 = vadd.xlane.f32.xlu0 %v265
    %v267 = vpop.xlane.xlu0 %266
    %v268 = vrcp.pop %v264
    %v269 = vrcp.pop %v267
    %v270 = vmul.f32 %v98, %v268
    %v271 = vmul.f32 %v101, %v269
    %v272 = vpack.c.bf16 %v261, %v259
    %v273 = vpack.c.bf16 %v271, %v270
    %v274 = vld [vmem:[%s4] sm:$0x1]
    %v276 = vlaneseq
    %v277 = vshrl.u32 %v276, 7
    %v278 = vsub.s32 0, %v277
    %v279 = vrot.slane %v274, %v278
    %281 = vxpose.xlu0.c.b16.start [1/8] %v272, 128
    %282 = vxpose.xlu0.c.b16.cont [2/8] 0, 128
    %283 = vxpose.xlu0.c.b16.cont [3/8] 0, 128
    %284 = vxpose.xlu0.c.b16.cont [4/8] 0, 128
    %285 = vxpose.xlu0.c.b16.cont [5/8] 0, 128
    %286 = vxpose.xlu0.c.b16.cont [6/8] 0, 128
    %287 = vxpose.xlu0.c.b16.cont [7/8] 0, 128
    %288 = vxpose.xlu0.c.b16.end [8/8] 0, 128
    %v289 = vpop.trf.xlu0
    %v290 = vpop.trf.xlu0
    %v291 = vpop.trf.xlu0
    %v292 = vpop.trf.xlu0
    %v293 = vpop.trf.xlu0
    %v294 = vpop.trf.xlu0
    %v295 = vpop.trf.xlu0
    %v296 = vpop.trf.xlu0
    %v298 = vsel %vm249, %v289, 0
    %300 = vmatprep.subr.bf16.mxu0 0
    %301 = vmatpush1.bf16.msra.mxu0 0
    %302 = vmatprep.subr.bf16.mxu0 0
    %303 = vmatpush1.bf16.msra.mxu0 0
    %304 = vmatprep.subr.bf16.mxu0 0
    %305 = vmatpush1.bf16.msra.mxu0 0
    %306 = vmatprep.subr.bf16.mxu0 0
    %307 = vmatpush1.bf16.msra.mxu0 0
    %308 = vmatprep.subr.bf16.mxu0 0
    %309 = vmatpush1.bf16.msra.mxu0 0
    %310 = vmatprep.subr.bf16.mxu0 0
    %311 = vmatpush1.bf16.msra.mxu0 0
    %312 = vmatprep.subr.bf16.mxu0 0
    %313 = vmatpush1.bf16.msra.mxu0 0
    %314 = vmatprep.subr.bf16.mxu0 0
    %315 = vmatpush1.bf16.msra.mxu0 %v273
    %316 = vmatprep.subr.bf16.mxu0 0
    %317 = vmatpush2.bf16.msra.mxu0 0
    %318 = vmatprep.subr.bf16.mxu0 0
    %319 = vmatpush2.bf16.msra.mxu0 0
    %320 = vmatprep.subr.bf16.mxu0 0
    %321 = vmatpush2.bf16.msra.mxu0 0
    %322 = vmatprep.subr.bf16.mxu0 0
    %323 = vmatpush2.bf16.msra.mxu0 0
    %324 = vmatprep.subr.bf16.mxu0 0
    %325 = vmatpush2.bf16.msra.mxu0 0
    %326 = vmatprep.subr.bf16.mxu0 0
    %327 = vmatpush2.bf16.msra.mxu0 0
    %328 = vmatprep.subr.bf16.mxu0 0
    %329 = vmatpush2.bf16.msra.mxu0 0
    %330 = vmatprep.subr.bf16.mxu0 0
    %331 = vmatpush2.bf16.msra.mxu0 0
    %332 = vmatprep.mubr.bf16.mxu0 0
    %333 = vmatmul.mubr.bf16.gmra.mxu0 %v298
    %v334 = vpop.f32.mrf.mxu0
    %v335 = vadd.f32 %v279, %v334
    %v336 = vpop.f32.mrf.mxu0
    %v337 = vpop.f32.mrf.mxu0
    %v338 = vadd.f32 %v279, %v337
    %v339 = vpop.f32.mrf.mxu0
    %340 = vdwg.mxu0
    %341 = vst.msk [vmem:[#allocation7] sm:$0xff] %vm249, %v335
    %342 = vst.msk [vmem:[#allocation7 + $0x8] sm:$0xff] %vm249, %v338
    %343 = vset.pattern.permute.xlu0 3
    %344 = vperm.xlu0 %343, %v181
    %v345 = vpop.permute.xlu0 %344
    %347 = vset.pattern.permute.xlu0 3
    %348 = vperm.xlu0 %347, %v186
    %v349 = vpop.permute.xlu0 %348
    %v351 = vlaneseq
    %v352 = vshrl.u32 %v351, 7
    %v353 = vsub.s32 1, %v352
    %v354 = vrot.slane %v205, %v353
    %v355 = vadd.f32 %v345, %v354
    %v356 = vadd.f32 %v349, %v354
    %vm357 = vcmp.gt.f32.partialorder %v355, 0.0
    %vm358 = vcmp.gt.f32.partialorder %v356, 0.0
    %v359 = vmul.f32 %v355, 0.2
    %v360 = vmul.f32 %v356, 0.2
    %v361 = vsel %vm357, %v355, %v359
    %v362 = vsel %vm358, %v356, %v360
    %v363 = vsel %vm245, %v361, -1e+30
    %v364 = vsel %vm246, %v362, -1e+30
    %v365 = vsel %vm249, %v363, -inf
    %366 = vmax.xlane.f32.xlu0 %v365
    %v367 = vpop.xlane.xlu0 %366
    %v368 = vsel %vm249, %v364, -inf
    %369 = vmax.xlane.f32.xlu0 %v368
    %v370 = vpop.xlane.xlu0 %369
    %v371 = vsub.f32 %v363, %v367
    %v372 = vsub.f32 %v364, %v370
    %v373 = vmul.f32 %v371, 1.442695
    %v374 = vpow.pop %v373
    %v375 = vmul.f32 %v372, 1.442695
    %v376 = vpow.pop %v375
    %v377 = vsel %vm249, %v374, 0.0
    %378 = vadd.xlane.f32.xlu0 %v377
    %v379 = vpop.xlane.xlu0 %378
    %v380 = vsel %vm249, %v376, 0.0
    %381 = vadd.xlane.f32.xlu0 %v380
    %v382 = vpop.xlane.xlu0 %381
    %v383 = vrcp.pop %v379
    %v384 = vrcp.pop %v382
    %v385 = vmul.f32 %v98, %v383
    %v386 = vmul.f32 %v101, %v384
    %v387 = vpack.c.bf16 %v376, %v374
    %v388 = vpack.c.bf16 %v386, %v385
    %v389 = vld [vmem:[%s4] sm:$0x1]
    %v391 = vlaneseq
    %v392 = vshrl.u32 %v391, 7
    %v393 = vsub.s32 0, %v392
    %v394 = vrot.slane %v389, %v393
    %395 = vxpose.xlu0.c.b16.start [1/8] %v387, 128
    %396 = vxpose.xlu0.c.b16.cont [2/8] 0, 128
    %397 = vxpose.xlu0.c.b16.cont [3/8] 0, 128
    %398 = vxpose.xlu0.c.b16.cont [4/8] 0, 128
    %399 = vxpose.xlu0.c.b16.cont [5/8] 0, 128
    %400 = vxpose.xlu0.c.b16.cont [6/8] 0, 128
    %401 = vxpose.xlu0.c.b16.cont [7/8] 0, 128
    %402 = vxpose.xlu0.c.b16.end [8/8] 0, 128
    %v403 = vpop.trf.xlu0
    %v404 = vpop.trf.xlu0
    %v405 = vpop.trf.xlu0
    %v406 = vpop.trf.xlu0
    %v407 = vpop.trf.xlu0
    %v408 = vpop.trf.xlu0
    %v409 = vpop.trf.xlu0
    %v410 = vpop.trf.xlu0
    %412 = vrot.lane.b32.xlu0 %v388, 112
    %v413 = vpop.permute.xlu0 %412
    %415 = vrot.lane.b32.xlu0 %v394, 112
    %v416 = vpop.permute.xlu0 %415
    %v419 = vsel %vm249, %v403, 0
    %421 = vmatprep.subr.bf16.mxu0 0
    %422 = vmatpush1.bf16.msra.mxu0 0
    %423 = vmatprep.subr.bf16.mxu0 0
    %424 = vmatpush1.bf16.msra.mxu0 0
    %425 = vmatprep.subr.bf16.mxu0 0
    %426 = vmatpush1.bf16.msra.mxu0 0
    %427 = vmatprep.subr.bf16.mxu0 0
    %428 = vmatpush1.bf16.msra.mxu0 0
    %429 = vmatprep.subr.bf16.mxu0 0
    %430 = vmatpush1.bf16.msra.mxu0 0
    %431 = vmatprep.subr.bf16.mxu0 0
    %432 = vmatpush1.bf16.msra.mxu0 0
    %433 = vmatprep.subr.bf16.mxu0 0
    %434 = vmatpush1.bf16.msra.mxu0 0
    %435 = vmatprep.subr.bf16.mxu0 0
    %436 = vmatpush1.bf16.msra.mxu0 %v413
    %437 = vmatprep.subr.bf16.mxu0 0
    %438 = vmatpush2.bf16.msra.mxu0 0
    %439 = vmatprep.subr.bf16.mxu0 0
    %440 = vmatpush2.bf16.msra.mxu0 0
    %441 = vmatprep.subr.bf16.mxu0 0
    %442 = vmatpush2.bf16.msra.mxu0 0
    %443 = vmatprep.subr.bf16.mxu0 0
    %444 = vmatpush2.bf16.msra.mxu0 0
    %445 = vmatprep.subr.bf16.mxu0 0
    %446 = vmatpush2.bf16.msra.mxu0 0
    %447 = vmatprep.subr.bf16.mxu0 0
    %448 = vmatpush2.bf16.msra.mxu0 0
    %449 = vmatprep.subr.bf16.mxu0 0
    %450 = vmatpush2.bf16.msra.mxu0 0
    %451 = vmatprep.subr.bf16.mxu0 0
    %452 = vmatpush2.bf16.msra.mxu0 0
    %453 = vmatprep.mubr.bf16.mxu0 0
    %454 = vmatmul.mubr.bf16.gmra.mxu0 %v419
    %v455 = vpop.f32.mrf.mxu0
    %v456 = vadd.f32 %v416, %v455
    %v457 = vpop.f32.mrf.mxu0
    %v458 = vpop.f32.mrf.mxu0
    %v459 = vadd.f32 %v416, %v458
    %v460 = vpop.f32.mrf.mxu0
    %461 = vdwg.mxu0
    %464 = vrot.lane.b32.xlu0 %v456, 16
    %v465 = vpop.permute.xlu0 %464
    %466 = vrot.lane.b32.xlu0 %v459, 16
    %v467 = vpop.permute.xlu0 %466
    %vm470 = vcmask 261248
    %471 = vst.msk [vmem:[#allocation7] sm:$0xff] %vm470, %v465
    %472 = vst.msk [vmem:[#allocation7 + $0x8] sm:$0xff] %vm470, %v467
    // Predicated region
    $region30: #{tpu_custom_call.1} parent=1 // pred_check
      _
    $region31: #{tpu_custom_call.1} parent=1 // pred_check_branch
      %474 = sbr.rel (0) target = $region33
    $region32: #{tpu_custom_call.1} parent=1 // pred_region
      %s476 = ssub.s32 256, 256
      %477 = vsyncadd [#allocation4], %s476
      %s478 = sshll.u32 [#allocation7], 4
      %s479 = int_to_ptr.vmem [resolvable:$true] %s478
      %484 = dma.vmem_to_hbm [thread:$0]  %s479, 256, %s5, [#allocation4], 128, 128, 8
    $region33: #{tpu_custom_call.1} parent=1 // pred_fallthru
      _
    // Predicated region
    $region34: #{tpu_custom_call.1} parent=1 // pred_check
      _
    $region35: #{tpu_custom_call.1} parent=1 // pred_check_branch
      %486 = sbr.rel (0) target = $region37
    $region36: #{tpu_custom_call.1} parent=1 // pred_region
      %487 = dma.done [#allocation4], 256
    $region37: #{tpu_custom_call.1} parent=1 // pred_fallthru
      _
    %488 = vsyncpa [#allocation3], 1
    %489 = vsyncpa [#allocation6], 1
    %490 = vsyncpa [#allocation4], 1

</llo_original>
